<compile_context>
chip_gen: v7x
topology: tpu7x:2x2x1
jax: 0.10.0
libtpu: 0.0.40
codegen_flags: <defaults>
</compile_context>

<pallas_src>
import functools

import jax
import jax.numpy as jnp
from jax import lax
from jax.experimental import pallas as pl
from jax.experimental.pallas import tpu as pltpu


def _round_up(x, m):
    return (x + m - 1) // m * m


def _contrastive_kernel(vid_ref, txt_ref, d1m_ref, d2m_ref, lt_ref, li_ref,
                        *, min_val, batch, tile_i, tile_j):
    i = pl.program_id(0)          # vid row block   -- "parallel"
    j = pl.program_id(1)          # txt col block   -- reduction axis for lt ("arbitrary")

    # scores = vid_i @ txt_j.T; transpose folded into the MXU operand feed, bf16 in / f32 acc.
    scores = lax.dot_general(
        vid_ref[...], txt_ref[...],
        dimension_numbers=(((1,), (1,)), ((), ())),
        preferred_element_type=jnp.float32)                     # (tile_i, tile_j) f32

    d1m = d1m_ref[...]            # (tile_i, 1) f32 = diag[row] - margin
    d2m = d2m_ref[...]            # (1, tile_j) f32 = diag[col] - margin

    # Unmasked clamp (4 VPU passes over the (T,T) tile total).  Diagonal entries evaluate to
    # the constant max(margin, min_val); that constant is removed in the wrapper epilogue, so
    # no per-tile iota/compare/where is needed for the eye mask.
    loss_txt = jnp.maximum(scores - d1m, min_val)
    loss_img = jnp.maximum(scores - d2m, min_val)

    # Padded rows/cols (B not tile-aligned) excluded via the thin MXU ones-vectors; these are
    # (1, T) ops, negligible vs the (T, T) work, and all-ones for aligned batches.
    col_ids = j * tile_j + lax.broadcasted_iota(jnp.int32, (1, tile_j), 1)
    row_ids = i * tile_i + lax.broadcasted_iota(jnp.int32, (1, tile_i), 1)
    valid_cols = (col_ids < batch).astype(jnp.float32)          # (1, tile_j)
    valid_rows = (row_ids < batch).astype(jnp.float32)          # (1, tile_i)

    # Both reductions on the MXU -> lane-dense (1, T) vectors in the same layout
    # (no cross-sublane XLU reduce, no layout fix-up, dense stores).
    lt_part = lax.dot_general(                # sum loss_txt over cols -> (1, tile_i) by row
        valid_cols, loss_txt,
        dimension_numbers=(((1,), (1,)), ((), ())),
        preferred_element_type=jnp.float32)
    li_part = lax.dot_general(                # sum loss_img over rows -> (1, tile_j) by col
        valid_rows, loss_img,
        dimension_numbers=(((1,), (0,)), ((), ())),
        preferred_element_type=jnp.float32)

    # li: one disjoint (1, tile_j) block per (i, j); partials over i combined in the wrapper
    # so the i axis stays safely "parallel" for the 2-TC megacore.
    li_ref[0] = li_part

    # lt: output block index constant across j -> resident VMEM accumulator.
    @pl.when(j == 0)
    def _():
        lt_ref[...] = jnp.zeros_like(lt_ref)

    lt_ref[...] += lt_part


def _pick_tiles(B, d_pad, in_bytes):
    """Column tile MXU-aligned; row tile as large as the VMEM budget / batch allow."""
    tile_j = 256 if B >= 256 else 128
    budget = 36 * 1024 * 1024          # double-buffered inputs + f32 intermediates, v7x-safe
    tile_i = tile_j
    for cand in (2048, 1024, 512):
        if cand < tile_j:
            continue
        if 2 * cand > _round_up(B, tile_j):
            continue                    # keep n_i >= 2 (megacore) and avoid over-padding B
        need = (2 * (cand + tile_j) * d_pad * in_bytes   # vid + txt double buffers
                + 3 * cand * tile_j * 4)                 # (tile_i, tile_j) f32 intermediates
        if need > budget:
            continue
        tile_i = cand
        break
    return tile_i, tile_j


def contrastive_loss(vid, txt, *, margin=0.2, min_val=1e-8, cast_f32_to_bf16=True):
    """Pallas implementation of ContrastiveLoss.forward(vid, txt) -> (B,) loss."""
    B, D = vid.shape
    assert txt.shape == (B, D)

    # Native MXU path: bf16 operands + f32 accumulation (f32 operands force multi-pass MXU
    # emulation and double the HBM/VMEM traffic).
    if cast_f32_to_bf16 and vid.dtype == jnp.float32:
        vid = vid.astype(jnp.bfloat16)
        txt = txt.astype(jnp.bfloat16)

    in_bytes = jnp.dtype(vid.dtype).itemsize
    d_pad = _round_up(D, 128)
    tile_i, tile_j = _pick_tiles(B, d_pad, in_bytes)
    b_pad = _round_up(B, tile_i)        # tile_i is a multiple of tile_j

    # Global diagonal diag[k] = <vid[k], txt[k]> from the UNPADDED arrays (O(B*D)), with the
    # margin folded in; only the (B,) vector is padded, not the big operands.
    diag_m = jnp.sum(vid.astype(jnp.float32) * txt.astype(jnp.float32), axis=-1) - margin
    if b_pad != B:
        diag_m = jnp.pad(diag_m, (0, b_pad - B))
    d1m_col = diag_m[:, None]           # (b_pad, 1)
    d2m_row = diag_m[None, :]           # (1, b_pad)

    # Pad the operands only when actually unaligned (zero padding on D keeps the contraction
    # exact; padded B rows/cols are excluded in-kernel and sliced off below).
    if (b_pad, d_pad) != (B, D):
        vid = jnp.pad(vid, ((0, b_pad - B), (0, d_pad - D)))
        txt = jnp.pad(txt, ((0, b_pad - B), (0, d_pad - D)))
    # TODO(synk): for very large D (>= ~8K) add a contraction grid axis with an accumulator
    # instead of loading all of d_pad per block.

    n_i = b_pad // tile_i
    n_j = b_pad // tile_j

    vmem_bytes = (2 * (tile_i + tile_j) * d_pad * in_bytes
                  + 3 * tile_i * tile_j * 4 + (8 << 20))
    vmem_bytes = int(min(max(vmem_bytes, 32 << 20), 48 << 20))   # <= 48 MiB: v7x-safe

    kernel = functools.partial(_contrastive_kernel, min_val=float(min_val), batch=B,
                               tile_i=tile_i, tile_j=tile_j)

    lt, li = pl.pallas_call(
        kernel,
        grid=(n_i, n_j),
        in_specs=[
            pl.BlockSpec((tile_i, d_pad), lambda i, j: (i, 0)),    # vid: resident across j
            pl.BlockSpec((tile_j, d_pad), lambda i, j: (j, 0)),    # txt: streamed over j
            pl.BlockSpec((tile_i, 1), lambda i, j: (i, 0)),        # diag - margin (column)
            pl.BlockSpec((1, tile_j), lambda i, j: (0, j)),        # diag - margin (row)
        ],
        out_specs=[
            pl.BlockSpec((1, tile_i), lambda i, j: (0, i)),        # lt: accumulated over j
            pl.BlockSpec((1, 1, tile_j), lambda i, j: (i, 0, j)),  # li: per-row-block partials
        ],
        out_shape=[
            jax.ShapeDtypeStruct((1, b_pad), jnp.float32),
            jax.ShapeDtypeStruct((n_i, 1, b_pad), jnp.float32),
        ],
        compiler_params=pltpu.CompilerParams(
            dimension_semantics=("parallel", "arbitrary"),
            vmem_limit_bytes=vmem_bytes),
    )(vid, txt, d1m_col, d2m_row)

    # Each row/col sum still contains its diagonal term max(margin, min_val); remove it and
    # apply both 1/B means in one pass over the (B,) outputs.
    corr = max(float(margin), float(min_val))
    lt_v = lt[0, :B]
    li_v = jnp.sum(li, axis=0)[0, :B]
    return (lt_v + li_v - 2.0 * corr) / B


def _reference(vid, txt, margin=0.2, min_val=1e-8):
    scores = jnp.dot(vid, txt.T, precision=lax.Precision.HIGHEST)
    diag = jnp.diag(scores)
    d1 = diag[:, None]
    d2 = diag[None, :]
    eye = jnp.eye(scores.shape[0], dtype=bool)
    loss_txt = jnp.where(eye, 0.0, jnp.maximum(margin + scores - d1, min_val))
    loss_img = jnp.where(eye, 0.0, jnp.maximum(margin + scores - d2, min_val))
    return loss_txt.mean(1) + loss_img.mean(0)


if __name__ == "__main__":
    key = jax.random.PRNGKey(0)
    k1, k2 = jax.random.split(key)
    B, D = 8, 32   # small embedding batch consistent with the module's forward
    # Quantised embeddings (exactly representable in bf16) so the self-test is insensitive to
    # the MXU accumulation path across TPU generations.
    vid = jax.random.randint(k1, (B, D), -4, 5).astype(jnp.float32) / 4.0
    txt = jax.random.randint(k2, (B, D), -4, 5).astype(jnp.float32) / 4.0

    margin = 0.2   # cfg.LOSS.PARAMS.margin (deterministic in-script value)

    out = contrastive_loss(vid, txt, margin=margin)
    out = jax.block_until_ready(out)

    ref = _reference(vid, txt, margin=margin)
    assert out.shape == (B,)
    assert jnp.allclose(out, ref, atol=1e-4, rtol=1e-5), (out, ref)
    print("KERNEL_OK")
</pallas_src>

<mosaic_0001>
module attributes {stable_mosaic.version = 11 : i64} {
  func.func @_contrastive_kernel(%arg0: i32, %arg1: i32, %arg2: memref<128x128xbf16, #tpu.memory_space<vmem>>, %arg3: memref<128x128xbf16, #tpu.memory_space<vmem>>, %arg4: memref<128x1xf32, #tpu.memory_space<vmem>>, %arg5: memref<1x128xf32, #tpu.memory_space<vmem>>, %arg6: memref<1x128xf32, #tpu.memory_space<vmem>>, %arg7: memref<1x1x128xf32, #tpu.memory_space<vmem>>) attributes {dimension_semantics = [#tpu.dimension_semantics<parallel>, #tpu.dimension_semantics<arbitrary>], iteration_bounds = array<i64: 1, 1>, scalar_prefetch = 0 : i64, scratch_operands = 0 : i64, tpu.core_type = #tpu.core_type<tc>, window_params = [{transform_indices = @transform_0, window_bounds = array<i64: 128, 128>}, {transform_indices = @transform_1, window_bounds = array<i64: 128, 128>}, {transform_indices = @transform_2, window_bounds = array<i64: 128, 1>}, {transform_indices = @transform_3, window_bounds = array<i64: 1, 128>}, {transform_indices = @transform_4, window_bounds = array<i64: 1, 128>}, {transform_indices = @transform_5, window_bounds = array<i64: 1, 1, 128>}]} {
    %c0 = arith.constant 0 : index
    %c0_0 = arith.constant 0 : index
    %0 = vector.load %arg2[%c0, %c0_0] : memref<128x128xbf16, #tpu.memory_space<vmem>>, vector<128x128xbf16>
    %c0_1 = arith.constant 0 : index
    %c0_2 = arith.constant 0 : index
    %1 = vector.load %arg3[%c0_1, %c0_2] : memref<128x128xbf16, #tpu.memory_space<vmem>>, vector<128x128xbf16>
    %cst = arith.constant dense<0.000000e+00> : vector<128x128xf32>
    %2 = tpu.matmul %0, %1, %cst {dimension_numbers = #tpu.dot_dimension_numbers<[1], [1], [0], [0], [0, 0, 1, 0], [], []>} : vector<128x128xbf16>, vector<128x128xbf16>, vector<128x128xf32> -> vector<128x128xf32>
    %c0_3 = arith.constant 0 : index
    %c0_4 = arith.constant 0 : index
    %3 = vector.load %arg4[%c0_3, %c0_4] : memref<128x1xf32, #tpu.memory_space<vmem>>, vector<128x1xf32>
    %c0_5 = arith.constant 0 : index
    %c0_6 = arith.constant 0 : index
    %4 = vector.load %arg5[%c0_5, %c0_6] : memref<1x128xf32, #tpu.memory_space<vmem>>, vector<1x128xf32>
    %5 = vector.broadcast %3 : vector<128x1xf32> to vector<128x128xf32>
    %6 = arith.subf %2, %5 : vector<128x128xf32>
    %cst_7 = arith.constant 9.99999993E-9 : f32
    %7 = vector.broadcast %cst_7 : f32 to vector<128x128xf32>
    %8 = arith.maximumf %6, %7 : vector<128x128xf32>
    %9 = vector.broadcast %4 : vector<1x128xf32> to vector<128x128xf32>
    %10 = arith.subf %2, %9 : vector<128x128xf32>
    %cst_8 = arith.constant 9.99999993E-9 : f32
    %11 = vector.broadcast %cst_8 : f32 to vector<128x128xf32>
    %12 = arith.maximumf %10, %11 : vector<128x128xf32>
    %c128_i32 = arith.constant 128 : i32
    %13 = arith.muli %arg1, %c128_i32 : i32
    %14 = tpu.iota {dimensions = array<i32: 1>} : vector<1x128xi32>
    %15 = vector.broadcast %13 : i32 to vector<1x128xi32>
    %16 = arith.addi %15, %14 : vector<1x128xi32>
    %c128_i32_9 = arith.constant 128 : i32
    %17 = arith.muli %arg0, %c128_i32_9 : i32
    %18 = tpu.iota {dimensions = array<i32: 1>} : vector<1x128xi32>
    %19 = vector.broadcast %17 : i32 to vector<1x128xi32>
    %20 = arith.addi %19, %18 : vector<1x128xi32>
    %c8_i32 = arith.constant 8 : i32
    %21 = vector.broadcast %c8_i32 : i32 to vector<1x128xi32>
    %22 = arith.cmpi slt, %16, %21 : vector<1x128xi32>
    %23 = arith.extui %22 : vector<1x128xi1> to vector<1x128xi32>
    %24 = arith.sitofp %23 : vector<1x128xi32> to vector<1x128xf32>
    %c8_i32_10 = arith.constant 8 : i32
    %25 = vector.broadcast %c8_i32_10 : i32 to vector<1x128xi32>
    %26 = arith.cmpi slt, %20, %25 : vector<1x128xi32>
    %27 = arith.extui %26 : vector<1x128xi1> to vector<1x128xi32>
    %28 = arith.sitofp %27 : vector<1x128xi32> to vector<1x128xf32>
    %cst_11 = arith.constant dense<0.000000e+00> : vector<1x128xf32>
    %29 = tpu.matmul %24, %8, %cst_11 {dimension_numbers = #tpu.dot_dimension_numbers<[1], [1], [0], [0], [0, 0, 1, 0], [], []>} : vector<1x128xf32>, vector<128x128xf32>, vector<1x128xf32> -> vector<1x128xf32>
    %cst_12 = arith.constant dense<0.000000e+00> : vector<1x128xf32>
    %30 = tpu.matmul %28, %12, %cst_12 {dimension_numbers = #tpu.dot_dimension_numbers<[1], [0], [0], [1], [0, 0, 1, 1], [], []>} : vector<1x128xf32>, vector<128x128xf32>, vector<1x128xf32> -> vector<1x128xf32>
    %c0_13 = arith.constant 0 : index
    %c0_14 = arith.constant 0 : index
    %c0_15 = arith.constant 0 : index
    %31 = vector.load %arg7[%c0_13, %c0_14, %c0_15] : memref<1x1x128xf32, #tpu.memory_space<vmem>>, vector<1x1x128xf32>
    %32 = vector.shape_cast %31 : vector<1x1x128xf32> to vector<1x128xf32>
    %33 = vector.shape_cast %30 : vector<1x128xf32> to vector<1x1x128xf32>
    tpu.vector_store %arg7[%c0_13, %c0_14, %c0_15], %33 {strides = array<i32>} : memref<1x1x128xf32, #tpu.memory_space<vmem>>, vector<1x1x128xf32>,
    %c0_i32 = arith.constant 0 : i32
    %34 = arith.cmpi eq, %arg1, %c0_i32 : i32
    %35 = arith.extui %34 : i1 to i32
    %c0_i32_16 = arith.constant 0 : i32
    %36 = arith.cmpi ne, %35, %c0_i32_16 : i32
    scf.if %36 {
      %cst_21 = arith.constant 0.000000e+00 : f32
      %40 = vector.broadcast %cst_21 : f32 to vector<1x128xf32>
      %c0_22 = arith.constant 0 : index
      %c0_23 = arith.constant 0 : index
      %41 = vector.load %arg6[%c0_22, %c0_23] : memref<1x128xf32, #tpu.memory_space<vmem>>, vector<1x128xf32>
      tpu.vector_store %arg6[%c0_22, %c0_23], %40 {strides = array<i32>} : memref<1x128xf32, #tpu.memory_space<vmem>>, vector<1x128xf32>,
    } else {
    }
    %c0_17 = arith.constant 0 : index
    %c0_18 = arith.constant 0 : index
    %37 = vector.load %arg6[%c0_17, %c0_18] : memref<1x128xf32, #tpu.memory_space<vmem>>, vector<1x128xf32>
    %38 = arith.addf %37, %29 : vector<1x128xf32>
    %c0_19 = arith.constant 0 : index
    %c0_20 = arith.constant 0 : index
    %39 = vector.load %arg6[%c0_19, %c0_20] : memref<1x128xf32, #tpu.memory_space<vmem>>, vector<1x128xf32>
    tpu.vector_store %arg6[%c0_19, %c0_20], %38 {strides = array<i32>} : memref<1x128xf32, #tpu.memory_space<vmem>>, vector<1x128xf32>,
    return
  }
  func.func @transform_0(%arg0: i32, %arg1: i32) -> (i32, i32) {
    %c0_i32 = arith.constant 0 : i32
    %c0_i32_0 = arith.constant 0 : i32
    return %arg0, %c0_i32 : i32, i32
  }
  func.func @transform_1(%arg0: i32, %arg1: i32) -> (i32, i32) {
    %c0_i32 = arith.constant 0 : i32
    %c0_i32_0 = arith.constant 0 : i32
    return %arg1, %c0_i32 : i32, i32
  }
  func.func @transform_2(%arg0: i32, %arg1: i32) -> (i32, i32) {
    %c0_i32 = arith.constant 0 : i32
    %c0_i32_0 = arith.constant 0 : i32
    return %arg0, %c0_i32 : i32, i32
  }
  func.func @transform_3(%arg0: i32, %arg1: i32) -> (i32, i32) {
    %c0_i32 = arith.constant 0 : i32
    %c0_i32_0 = arith.constant 0 : i32
    return %c0_i32, %arg1 : i32, i32
  }
  func.func @transform_4(%arg0: i32, %arg1: i32) -> (i32, i32) {
    %c0_i32 = arith.constant 0 : i32
    %c0_i32_0 = arith.constant 0 : i32
    return %c0_i32, %arg0 : i32, i32
  }
  func.func @transform_5(%arg0: i32, %arg1: i32) -> (i32, i32, i32) {
    %c0_i32 = arith.constant 0 : i32
    %c0_i32_0 = arith.constant 0 : i32
    return %arg0, %c0_i32, %arg1 : i32, i32, i32
  }
}

</mosaic_0001>

<llo_original>
// kernel: tpu_custom_call.1
$region0: #{tpu_custom_call.1}
  #allocation0 [shape = 'u32[]', space=smem, size = 0x4, offset = 0x4, fixed_abs, tag = 'smem constant byte address 0x4 - core index']
  #allocation1 [shape = 'u32[144,128]{1,0:T(1,128)}', space=vmem, size = 0x12000, scoped, tag = 'internal scratch']
  %s0 = inlined_call_operand.vmem [shape: bf16[128,128], index: 0, kind: input, shape index: {}]
  %s1 = inlined_call_operand.vmem [shape: bf16[128,128], index: 1, kind: input, shape index: {}]
  %s2 = inlined_call_operand.vmem [shape: f32[128,1], index: 2, kind: input, shape index: {}]
  %s3 = inlined_call_operand.vmem [shape: f32[1,128], index: 3, kind: input, shape index: {}]
  %s4 = inlined_call_operand.hbm [shape: f32[1,128], index: 4, kind: output, shape index: {0}]
  %s5 = inlined_call_operand.hbm [shape: f32[1,1,128], index: 5, kind: output, shape index: {1}]
  %6 = xla_tuple %s4, %s5
  %s7 = sld [smem:[#allocation0]]
  $region38: #{tpu_custom_call.1} parent=0
    _
  %s9 = ssub.s32 1, %s7
  %s10 = scalar_select 0, %s9, %s7
  $region1: #{tpu_custom_call.1} parent=0
    #allocation2 [shape = 'u8[512]{0}', space=vmem, size = 0x400, scoped, tag = 'output window, operand 0, single buffered']
    #allocation3 [shape = 's32[1]{0}', space=sflag, size = 0x4, scoped, tag = 'scoped memory for tpu_custom_call.1']
    #allocation4 [shape = 'u8[512]{0}', space=vmem, size = 0x400, scoped, tag = 'output window, operand 1, single buffered']
    #allocation5 [shape = 's32[1]{0}', space=sflag, size = 0x4, scoped, tag = 'scoped memory for tpu_custom_call.1']
    %11 = vsyncpa [#allocation3], 0
    %12 = vsyncpa [#allocation5], 0
    // Predicated region
    $region2: #{tpu_custom_call.1} parent=1 // pred_check
      _
    $region3: #{tpu_custom_call.1} parent=1 // pred_check_branch
      %14 = sbr.rel (0) target = $region5
    $region4: #{tpu_custom_call.1} parent=1 // pred_region
      _
    $region5: #{tpu_custom_call.1} parent=1 // pred_fallthru
      _
    // Predicated region
    $region6: #{tpu_custom_call.1} parent=1 // pred_check
      _
    $region7: #{tpu_custom_call.1} parent=1 // pred_check_branch
      %16 = sbr.rel (0) target = $region9
    $region8: #{tpu_custom_call.1} parent=1 // pred_region
      _
    $region9: #{tpu_custom_call.1} parent=1 // pred_fallthru
      _
    // Predicated region
    $region10: #{tpu_custom_call.1} parent=1 // pred_check
      _
    $region11: #{tpu_custom_call.1} parent=1 // pred_check_branch
      %18 = sbr.rel (0) target = $region13
    $region12: #{tpu_custom_call.1} parent=1 // pred_region
      _
    $region13: #{tpu_custom_call.1} parent=1 // pred_fallthru
      _
    // Predicated region
    $region14: #{tpu_custom_call.1} parent=1 // pred_check
      _
    $region15: #{tpu_custom_call.1} parent=1 // pred_check_branch
      %20 = sbr.rel (0) target = $region17
    $region16: #{tpu_custom_call.1} parent=1 // pred_region
      _
    $region17: #{tpu_custom_call.1} parent=1 // pred_fallthru
      _
    %v22 = vld [vmem:[%s0] sm:$0xf]
    %v23 = vld [vmem:[%s0 + $0x4] sm:$0xf]
    %v24 = vld [vmem:[%s0 + $0x8] sm:$0xf]
    %v25 = vld [vmem:[%s0 + $0xc] sm:$0xf]
    %v26 = vld [vmem:[%s0 + $0x10] sm:$0xf]
    %v27 = vld [vmem:[%s0 + $0x14] sm:$0xf]
    %v28 = vld [vmem:[%s0 + $0x18] sm:$0xf]
    %v29 = vld [vmem:[%s0 + $0x1c] sm:$0xf]
    %v30 = vld [vmem:[%s0 + $0x20] sm:$0xf]
    %v31 = vld [vmem:[%s0 + $0x24] sm:$0xf]
    %v32 = vld [vmem:[%s0 + $0x28] sm:$0xf]
    %v33 = vld [vmem:[%s0 + $0x2c] sm:$0xf]
    %v34 = vld [vmem:[%s0 + $0x30] sm:$0xf]
    %v35 = vld [vmem:[%s0 + $0x34] sm:$0xf]
    %v36 = vld [vmem:[%s0 + $0x38] sm:$0xf]
    %v37 = vld [vmem:[%s0 + $0x3c] sm:$0xf]
    %v38 = vld [vmem:[%s1] sm:$0xf]
    %v39 = vld [vmem:[%s1 + $0x4] sm:$0xf]
    %v40 = vld [vmem:[%s1 + $0x8] sm:$0xf]
    %v41 = vld [vmem:[%s1 + $0xc] sm:$0xf]
    %v42 = vld [vmem:[%s1 + $0x10] sm:$0xf]
    %v43 = vld [vmem:[%s1 + $0x14] sm:$0xf]
    %v44 = vld [vmem:[%s1 + $0x18] sm:$0xf]
    %v45 = vld [vmem:[%s1 + $0x1c] sm:$0xf]
    %v46 = vld [vmem:[%s1 + $0x20] sm:$0xf]
    %v47 = vld [vmem:[%s1 + $0x24] sm:$0xf]
    %v48 = vld [vmem:[%s1 + $0x28] sm:$0xf]
    %v49 = vld [vmem:[%s1 + $0x2c] sm:$0xf]
    %v50 = vld [vmem:[%s1 + $0x30] sm:$0xf]
    %v51 = vld [vmem:[%s1 + $0x34] sm:$0xf]
    %v52 = vld [vmem:[%s1 + $0x38] sm:$0xf]
    %v53 = vld [vmem:[%s1 + $0x3c] sm:$0xf]
    %v70 = vunpack.c.l.b16 %v22
    %v71 = vunpack.c.l.b16 %v23
    %v72 = vunpack.c.l.b16 %v24
    %v73 = vunpack.c.l.b16 %v25
    %v74 = vunpack.c.l.b16 %v26
    %v75 = vunpack.c.l.b16 %v27
    %v76 = vunpack.c.l.b16 %v28
    %v77 = vunpack.c.l.b16 %v29
    %v78 = vunpack.c.l.b16 %v30
    %v79 = vunpack.c.l.b16 %v31
    %v80 = vunpack.c.l.b16 %v32
    %v81 = vunpack.c.l.b16 %v33
    %v82 = vunpack.c.l.b16 %v34
    %v83 = vunpack.c.l.b16 %v35
    %v84 = vunpack.c.l.b16 %v36
    %v85 = vunpack.c.l.b16 %v37
    %v86 = vpack.c.b16 %v71, %v70
    %v87 = vpack.c.b16 %v73, %v72
    %v88 = vpack.c.b16 %v75, %v74
    %v89 = vpack.c.b16 %v77, %v76
    %v90 = vpack.c.b16 %v79, %v78
    %v91 = vpack.c.b16 %v81, %v80
    %v92 = vpack.c.b16 %v83, %v82
    %v93 = vpack.c.b16 %v85, %v84
    %v118 = vunpack.c.l.b16 %v38
    %v119 = vunpack.c.l.b16 %v39
    %v120 = vunpack.c.l.b16 %v40
    %v121 = vunpack.c.l.b16 %v41
    %v122 = vunpack.c.l.b16 %v42
    %v123 = vunpack.c.l.b16 %v43
    %v124 = vunpack.c.l.b16 %v44
    %v125 = vunpack.c.l.b16 %v45
    %v126 = vunpack.c.l.b16 %v46
    %v127 = vunpack.c.l.b16 %v47
    %v128 = vunpack.c.l.b16 %v48
    %v129 = vunpack.c.l.b16 %v49
    %v130 = vunpack.c.l.b16 %v50
    %v131 = vunpack.c.l.b16 %v51
    %v132 = vunpack.c.l.b16 %v52
    %v133 = vunpack.c.l.b16 %v53
    %v134 = vpack.c.b16 %v119, %v118
    %v135 = vpack.c.b16 %v121, %v120
    %v136 = vpack.c.b16 %v123, %v122
    %v137 = vpack.c.b16 %v125, %v124
    %v138 = vpack.c.b16 %v127, %v126
    %v139 = vpack.c.b16 %v129, %v128
    %v140 = vpack.c.b16 %v131, %v130
    %v141 = vpack.c.b16 %v133, %v132
    %150 = vmatprep.subr.bf16.mxu0 0
    %151 = vmatpush1.bf16.xpose.msra.mxu0 %v134
    %152 = vmatprep.subr.bf16.mxu0 0
    %153 = vmatpush1.bf16.xpose.msra.mxu0 %v135
    %154 = vmatprep.subr.bf16.mxu0 0
    %155 = vmatpush1.bf16.xpose.msra.mxu0 %v136
    %156 = vmatprep.subr.bf16.mxu0 0
    %157 = vmatpush1.bf16.xpose.msra.mxu0 %v137
    %158 = vmatprep.subr.bf16.mxu0 0
    %159 = vmatpush1.bf16.xpose.msra.mxu0 %v138
    %160 = vmatprep.subr.bf16.mxu0 0
    %161 = vmatpush1.bf16.xpose.msra.mxu0 %v139
    %162 = vmatprep.subr.bf16.mxu0 0
    %163 = vmatpush1.bf16.xpose.msra.mxu0 %v140
    %164 = vmatprep.subr.bf16.mxu0 0
    %165 = vmatpush1.bf16.xpose.msra.mxu0 %v141
    %166 = vmatprep.subr.bf16.mxu0 0
    %167 = vmatpush1.bf16.xpose.msra.mxu0 0
    %168 = vmatprep.subr.bf16.mxu0 0
    %169 = vmatpush1.bf16.xpose.msra.mxu0 0
    %170 = vmatprep.subr.bf16.mxu0 0
    %171 = vmatpush1.bf16.xpose.msra.mxu0 0
    %172 = vmatprep.subr.bf16.mxu0 0
    %173 = vmatpush1.bf16.xpose.msra.mxu0 0
    %174 = vmatprep.subr.bf16.mxu0 0
    %175 = vmatpush1.bf16.xpose.msra.mxu0 0
    %176 = vmatprep.subr.bf16.mxu0 0
    %177 = vmatpush1.bf16.xpose.msra.mxu0 0
    %178 = vmatprep.subr.bf16.mxu0 0
    %179 = vmatpush1.bf16.xpose.msra.mxu0 0
    %180 = vmatprep.subr.bf16.mxu0 0
    %181 = vmatpush1.bf16.xpose.msra.mxu0 0
    %182 = vmatprep.mubr.bf16.mxu0 0
    %183 = vmatmul.mubr.bf16.gmra.mrb[0].mxu0 %v86
    %v184 = vpop.f32.mrb[0].mxu0
    %v185 = vadd.f32 0.0, %v184
    %v186 = vpop.f32.mrb[0].mxu0
    %v187 = vpop.f32.mrb[0].mxu0
    %v188 = vadd.f32 0.0, %v187
    %v189 = vpop.f32.mrb[0].mxu0
    %190 = vmatprep.mubr.bf16.mxu0 0
    %191 = vmatmul.mubr.bf16.gmra.mrb[0].mxu0 %v87
    %v192 = vpop.f32.mrb[0].mxu0
    %v193 = vadd.f32 0.0, %v192
    %v194 = vpop.f32.mrb[0].mxu0
    %v195 = vpop.f32.mrb[0].mxu0
    %v196 = vadd.f32 0.0, %v195
    %v197 = vpop.f32.mrb[0].mxu0
    %198 = vmatprep.mubr.bf16.mxu0 0
    %199 = vmatmul.mubr.bf16.gmra.mrb[0].mxu0 %v88
    %v200 = vpop.f32.mrb[0].mxu0
    %v201 = vadd.f32 0.0, %v200
    %v202 = vpop.f32.mrb[0].mxu0
    %v203 = vpop.f32.mrb[0].mxu0
    %v204 = vadd.f32 0.0, %v203
    %v205 = vpop.f32.mrb[0].mxu0
    %206 = vmatprep.mubr.bf16.mxu0 0
    %207 = vmatmul.mubr.bf16.gmra.mrb[0].mxu0 %v89
    %v208 = vpop.f32.mrb[0].mxu0
    %v209 = vadd.f32 0.0, %v208
    %v210 = vpop.f32.mrb[0].mxu0
    %v211 = vpop.f32.mrb[0].mxu0
    %v212 = vadd.f32 0.0, %v211
    %v213 = vpop.f32.mrb[0].mxu0
    %214 = vmatprep.mubr.bf16.mxu0 0
    %215 = vmatmul.mubr.bf16.gmra.mrb[0].mxu0 %v90
    %v216 = vpop.f32.mrb[0].mxu0
    %v217 = vadd.f32 0.0, %v216
    %v218 = vpop.f32.mrb[0].mxu0
    %v219 = vpop.f32.mrb[0].mxu0
    %v220 = vadd.f32 0.0, %v219
    %v221 = vpop.f32.mrb[0].mxu0
    %222 = vmatprep.mubr.bf16.mxu0 0
    %223 = vmatmul.mubr.bf16.gmra.mrb[0].mxu0 %v91
    %v224 = vpop.f32.mrb[0].mxu0
    %v225 = vadd.f32 0.0, %v224
    %v226 = vpop.f32.mrb[0].mxu0
    %v227 = vpop.f32.mrb[0].mxu0
    %v228 = vadd.f32 0.0, %v227
    %v229 = vpop.f32.mrb[0].mxu0
    %230 = vmatprep.mubr.bf16.mxu0 0
    %231 = vmatmul.mubr.bf16.gmra.mrb[0].mxu0 %v92
    %v232 = vpop.f32.mrb[0].mxu0
    %v233 = vadd.f32 0.0, %v232
    %v234 = vpop.f32.mrb[0].mxu0
    %v235 = vpop.f32.mrb[0].mxu0
    %v236 = vadd.f32 0.0, %v235
    %v237 = vpop.f32.mrb[0].mxu0
    %238 = vmatprep.mubr.bf16.mxu0 0
    %239 = vmatmul.mubr.bf16.gmra.mrb[0].mxu0 %v93
    %v240 = vpop.f32.mrb[0].mxu0
    %v241 = vadd.f32 0.0, %v240
    %v242 = vpop.f32.mrb[0].mxu0
    %v243 = vpop.f32.mrb[0].mxu0
    %v244 = vadd.f32 0.0, %v243
    %v245 = vpop.f32.mrb[0].mxu0
    %246 = vdwg.mxu0
    %v247 = vld [vmem:[%s2] sm:$0xff]
    %v248 = vld [vmem:[%s2 + $0x8] sm:$0xff]
    %v249 = vld [vmem:[%s2 + $0x10] sm:$0xff]
    %v250 = vld [vmem:[%s2 + $0x18] sm:$0xff]
    %v251 = vld [vmem:[%s2 + $0x20] sm:$0xff]
    %v252 = vld [vmem:[%s2 + $0x28] sm:$0xff]
    %v253 = vld [vmem:[%s2 + $0x30] sm:$0xff]
    %v254 = vld [vmem:[%s2 + $0x38] sm:$0xff]
    %v255 = vld [vmem:[%s2 + $0x40] sm:$0xff]
    %v256 = vld [vmem:[%s2 + $0x48] sm:$0xff]
    %v257 = vld [vmem:[%s2 + $0x50] sm:$0xff]
    %v258 = vld [vmem:[%s2 + $0x58] sm:$0xff]
    %v259 = vld [vmem:[%s2 + $0x60] sm:$0xff]
    %v260 = vld [vmem:[%s2 + $0x68] sm:$0xff]
    %v261 = vld [vmem:[%s2 + $0x70] sm:$0xff]
    %v262 = vld [vmem:[%s2 + $0x78] sm:$0xff]
    %v263 = vld [vmem:[%s3] sm:$0x1]
    %265 = vset.pattern.permute.xlu0 0
    %266 = vperm.xlu0 %265, %v247
    %v267 = vpop.permute.xlu0 %266
    %270 = vset.pattern.permute.xlu0 0
    %271 = vperm.xlu0 %270, %v248
    %v272 = vpop.permute.xlu0 %271
    %275 = vset.pattern.permute.xlu0 0
    %276 = vperm.xlu0 %275, %v249
    %v277 = vpop.permute.xlu0 %276
    %280 = vset.pattern.permute.xlu0 0
    %281 = vperm.xlu0 %280, %v250
    %v282 = vpop.permute.xlu0 %281
    %285 = vset.pattern.permute.xlu0 0
    %286 = vperm.xlu0 %285, %v251
    %v287 = vpop.permute.xlu0 %286
    %290 = vset.pattern.permute.xlu0 0
    %291 = vperm.xlu0 %290, %v252
    %v292 = vpop.permute.xlu0 %291
    %295 = vset.pattern.permute.xlu0 0
    %296 = vperm.xlu0 %295, %v253
    %v297 = vpop.permute.xlu0 %296
    %300 = vset.pattern.permute.xlu0 0
    %301 = vperm.xlu0 %300, %v254
    %v302 = vpop.permute.xlu0 %301
    %305 = vset.pattern.permute.xlu0 0
    %306 = vperm.xlu0 %305, %v255
    %v307 = vpop.permute.xlu0 %306
    %310 = vset.pattern.permute.xlu0 0
    %311 = vperm.xlu0 %310, %v256
    %v312 = vpop.permute.xlu0 %311
    %315 = vset.pattern.permute.xlu0 0
    %316 = vperm.xlu0 %315, %v257
    %v317 = vpop.permute.xlu0 %316
    %320 = vset.pattern.permute.xlu0 0
    %321 = vperm.xlu0 %320, %v258
    %v322 = vpop.permute.xlu0 %321
    %325 = vset.pattern.permute.xlu0 0
    %326 = vperm.xlu0 %325, %v259
    %v327 = vpop.permute.xlu0 %326
    %330 = vset.pattern.permute.xlu0 0
    %331 = vperm.xlu0 %330, %v260
    %v332 = vpop.permute.xlu0 %331
    %335 = vset.pattern.permute.xlu0 0
    %336 = vperm.xlu0 %335, %v261
    %v337 = vpop.permute.xlu0 %336
    %340 = vset.pattern.permute.xlu0 0
    %341 = vperm.xlu0 %340, %v262
    %v342 = vpop.permute.xlu0 %341
    %v344 = vsub.f32 %v185, %v267
    %v345 = vsub.f32 %v188, %v272
    %v346 = vsub.f32 %v193, %v277
    %v347 = vsub.f32 %v196, %v282
    %v348 = vsub.f32 %v201, %v287
    %v349 = vsub.f32 %v204, %v292
    %v350 = vsub.f32 %v209, %v297
    %v351 = vsub.f32 %v212, %v302
    %v352 = vsub.f32 %v217, %v307
    %v353 = vsub.f32 %v220, %v312
    %v354 = vsub.f32 %v225, %v317
    %v355 = vsub.f32 %v228, %v322
    %v356 = vsub.f32 %v233, %v327
    %v357 = vsub.f32 %v236, %v332
    %v358 = vsub.f32 %v241, %v337
    %v359 = vsub.f32 %v244, %v342
    %v360 = vmax.f32 %v344, 1e-08
    %v361 = vmax.f32 %v345, 1e-08
    %v362 = vmax.f32 %v346, 1e-08
    %v363 = vmax.f32 %v347, 1e-08
    %v364 = vmax.f32 %v348, 1e-08
    %v365 = vmax.f32 %v349, 1e-08
    %v366 = vmax.f32 %v350, 1e-08
    %v367 = vmax.f32 %v351, 1e-08
    %v368 = vmax.f32 %v352, 1e-08
    %v369 = vmax.f32 %v353, 1e-08
    %v370 = vmax.f32 %v354, 1e-08
    %v371 = vmax.f32 %v355, 1e-08
    %v372 = vmax.f32 %v356, 1e-08
    %v373 = vmax.f32 %v357, 1e-08
    %v374 = vmax.f32 %v358, 1e-08
    %v375 = vmax.f32 %v359, 1e-08
    %v377 = vlaneseq
    %v378 = vshrl.u32 %v377, 7
    %v379 = vsub.s32 0, %v378
    %v380 = vrot.slane %v263, %v379
    %v382 = vsub.f32 %v185, %v380
    %v383 = vsub.f32 %v188, %v380
    %v384 = vsub.f32 %v193, %v380
    %v385 = vsub.f32 %v196, %v380
    %v386 = vsub.f32 %v201, %v380
    %v387 = vsub.f32 %v204, %v380
    %v388 = vsub.f32 %v209, %v380
    %v389 = vsub.f32 %v212, %v380
    %v390 = vsub.f32 %v217, %v380
    %v391 = vsub.f32 %v220, %v380
    %v392 = vsub.f32 %v225, %v380
    %v393 = vsub.f32 %v228, %v380
    %v394 = vsub.f32 %v233, %v380
    %v395 = vsub.f32 %v236, %v380
    %v396 = vsub.f32 %v241, %v380
    %v397 = vsub.f32 %v244, %v380
    %v398 = vmax.f32 %v382, 1e-08
    %v399 = vmax.f32 %v383, 1e-08
    %v400 = vmax.f32 %v384, 1e-08
    %v401 = vmax.f32 %v385, 1e-08
    %v402 = vmax.f32 %v386, 1e-08
    %v403 = vmax.f32 %v387, 1e-08
    %v404 = vmax.f32 %v388, 1e-08
    %v405 = vmax.f32 %v389, 1e-08
    %v406 = vmax.f32 %v390, 1e-08
    %v407 = vmax.f32 %v391, 1e-08
    %v408 = vmax.f32 %v392, 1e-08
    %v409 = vmax.f32 %v393, 1e-08
    %v410 = vmax.f32 %v394, 1e-08
    %v411 = vmax.f32 %v395, 1e-08
    %v412 = vmax.f32 %v396, 1e-08
    %v413 = vmax.f32 %v397, 1e-08
    %s414 = smul.u32 0, 128
    %v415 = vlaneseq
    %v416 = vand.u32 %v415, 127
    %v417 = vstv %s414
    %v418 = vadd.s32 %v417, %v416
    %s419 = smul.u32 0, 128
    %v420 = vstv %s419
    %v421 = vadd.s32 %v420, %v416
    %vm422 = vcmp.lt.s32.totalorder %v418, 8
    %v423 = vsel %vm422, 1, 0
    %v424 = vcvt.s32.f32 %v423
    %vm425 = vcmp.lt.s32.totalorder %v421, 8
    %v426 = vsel %vm425, 1, 0
    %v427 = vcvt.s32.f32 %v426
    %428 = vmatprep.subr.mxu0 0.0
    %429 = vmatpush1.xpose.msra.mxu0 %v360
    %430 = vmatprep.subr.mxu0 0.0
    %431 = vmatpush1.xpose.msra.mxu0 %v361
    %432 = vmatprep.subr.mxu0 0.0
    %433 = vmatpush1.xpose.msra.mxu0 %v362
    %434 = vmatprep.subr.mxu0 0.0
    %435 = vmatpush1.xpose.msra.mxu0 %v363
    %436 = vmatprep.subr.mxu0 0.0
    %437 = vmatpush1.xpose.msra.mxu0 %v364
    %438 = vmatprep.subr.mxu0 0.0
    %439 = vmatpush1.xpose.msra.mxu0 %v365
    %440 = vmatprep.subr.mxu0 0.0
    %441 = vmatpush1.xpose.msra.mxu0 %v366
    %442 = vmatprep.subr.mxu0 0.0
    %443 = vmatpush1.xpose.msra.mxu0 %v367
    %444 = vmatprep.subr.mxu0 0.0
    %445 = vmatpush1.xpose.msra.mxu0 %v368
    %446 = vmatprep.subr.mxu0 0.0
    %447 = vmatpush1.xpose.msra.mxu0 %v369
    %448 = vmatprep.subr.mxu0 0.0
    %449 = vmatpush1.xpose.msra.mxu0 %v370
    %450 = vmatprep.subr.mxu0 0.0
    %451 = vmatpush1.xpose.msra.mxu0 %v371
    %452 = vmatprep.subr.mxu0 0.0
    %453 = vmatpush1.xpose.msra.mxu0 %v372
    %454 = vmatprep.subr.mxu0 0.0
    %455 = vmatpush1.xpose.msra.mxu0 %v373
    %456 = vmatprep.subr.mxu0 0.0
    %457 = vmatpush1.xpose.msra.mxu0 %v374
    %458 = vmatprep.subr.mxu0 0.0
    %459 = vmatpush1.xpose.msra.mxu0 %v375
    %460 = vmatprep.subr.mxu0 0.0
    %461 = vmatpush1.xpose.msra.mxu0 0.0
    %462 = vmatprep.subr.mxu0 0.0
    %463 = vmatpush1.xpose.msra.mxu0 0.0
    %464 = vmatprep.subr.mxu0 0.0
    %465 = vmatpush1.xpose.msra.mxu0 0.0
    %466 = vmatprep.subr.mxu0 0.0
    %467 = vmatpush1.xpose.msra.mxu0 0.0
    %468 = vmatprep.subr.mxu0 0.0
    %469 = vmatpush1.xpose.msra.mxu0 0.0
    %470 = vmatprep.subr.mxu0 0.0
    %471 = vmatpush1.xpose.msra.mxu0 0.0
    %472 = vmatprep.subr.mxu0 0.0
    %473 = vmatpush1.xpose.msra.mxu0 0.0
    %474 = vmatprep.subr.mxu0 0.0
    %475 = vmatpush1.xpose.msra.mxu0 0.0
    %476 = vmatprep.subr.mxu0 0.0
    %477 = vmatpush1.xpose.msra.mxu0 0.0
    %478 = vmatprep.subr.mxu0 0.0
    %479 = vmatpush1.xpose.msra.mxu0 0.0
    %480 = vmatprep.subr.mxu0 0.0
    %481 = vmatpush1.xpose.msra.mxu0 0.0
    %482 = vmatprep.subr.mxu0 0.0
    %483 = vmatpush1.xpose.msra.mxu0 0.0
    %484 = vmatprep.subr.mxu0 0.0
    %485 = vmatpush1.xpose.msra.mxu0 0.0
    %486 = vmatprep.subr.mxu0 0.0
    %487 = vmatpush1.xpose.msra.mxu0 0.0
    %488 = vmatprep.subr.mxu0 0.0
    %489 = vmatpush1.xpose.msra.mxu0 0.0
    %490 = vmatprep.subr.mxu0 0.0
    %491 = vmatpush1.xpose.msra.mxu0 0.0
    %492 = vmatprep.mubr.f32.mxu0 0.0
    %493 = vmatmul.mubr.f32.gmra.mrb[0].mxu0 %v424
    %v494 = vpop.f32.mrb[0].mxu0
    %v495 = vadd.f32 0.0, %v494
    %v496 = vpop.f32.mrb[0].mxu0
    %497 = vdwg.mxu0
    %498 = vmatprep.subr.mxu0 0.0
    %499 = vmatpush1.msra.mxu0 %v398
    %500 = vmatprep.subr.mxu0 0.0
    %501 = vmatpush1.msra.mxu0 %v399
    %502 = vmatprep.subr.mxu0 0.0
    %503 = vmatpush1.msra.mxu0 %v400
    %504 = vmatprep.subr.mxu0 0.0
    %505 = vmatpush1.msra.mxu0 %v401
    %506 = vmatprep.subr.mxu0 0.0
    %507 = vmatpush1.msra.mxu0 %v402
    %508 = vmatprep.subr.mxu0 0.0
    %509 = vmatpush1.msra.mxu0 %v403
    %510 = vmatprep.subr.mxu0 0.0
    %511 = vmatpush1.msra.mxu0 %v404
    %512 = vmatprep.subr.mxu0 0.0
    %513 = vmatpush1.msra.mxu0 %v405
    %514 = vmatprep.subr.mxu0 0.0
    %515 = vmatpush1.msra.mxu0 %v406
    %516 = vmatprep.subr.mxu0 0.0
    %517 = vmatpush1.msra.mxu0 %v407
    %518 = vmatprep.subr.mxu0 0.0
    %519 = vmatpush1.msra.mxu0 %v408
    %520 = vmatprep.subr.mxu0 0.0
    %521 = vmatpush1.msra.mxu0 %v409
    %522 = vmatprep.subr.mxu0 0.0
    %523 = vmatpush1.msra.mxu0 %v410
    %524 = vmatprep.subr.mxu0 0.0
    %525 = vmatpush1.msra.mxu0 %v411
    %526 = vmatprep.subr.mxu0 0.0
    %527 = vmatpush1.msra.mxu0 %v412
    %528 = vmatprep.subr.mxu0 0.0
    %529 = vmatpush1.msra.mxu0 %v413
    %530 = vmatprep.subr.mxu0 0.0
    %531 = vmatpush1.msra.mxu0 0.0
    %532 = vmatprep.subr.mxu0 0.0
    %533 = vmatpush1.msra.mxu0 0.0
    %534 = vmatprep.subr.mxu0 0.0
    %535 = vmatpush1.msra.mxu0 0.0
    %536 = vmatprep.subr.mxu0 0.0
    %537 = vmatpush1.msra.mxu0 0.0
    %538 = vmatprep.subr.mxu0 0.0
    %539 = vmatpush1.msra.mxu0 0.0
    %540 = vmatprep.subr.mxu0 0.0
    %541 = vmatpush1.msra.mxu0 0.0
    %542 = vmatprep.subr.mxu0 0.0
    %543 = vmatpush1.msra.mxu0 0.0
    %544 = vmatprep.subr.mxu0 0.0
    %545 = vmatpush1.msra.mxu0 0.0
    %546 = vmatprep.subr.mxu0 0.0
    %547 = vmatpush1.msra.mxu0 0.0
    %548 = vmatprep.subr.mxu0 0.0
    %549 = vmatpush1.msra.mxu0 0.0
    %550 = vmatprep.subr.mxu0 0.0
    %551 = vmatpush1.msra.mxu0 0.0
    %552 = vmatprep.subr.mxu0 0.0
    %553 = vmatpush1.msra.mxu0 0.0
    %554 = vmatprep.subr.mxu0 0.0
    %555 = vmatpush1.msra.mxu0 0.0
    %556 = vmatprep.subr.mxu0 0.0
    %557 = vmatpush1.msra.mxu0 0.0
    %558 = vmatprep.subr.mxu0 0.0
    %559 = vmatpush1.msra.mxu0 0.0
    %560 = vmatprep.subr.mxu0 0.0
    %561 = vmatpush1.msra.mxu0 0.0
    %562 = vmatprep.mubr.f32.mxu0 0.0
    %563 = vmatmul.mubr.f32.gmra.mrb[0].mxu0 %v427
    %v564 = vpop.f32.mrb[0].mxu0
    %v565 = vadd.f32 0.0, %v564
    %v566 = vpop.f32.mrb[0].mxu0
    %567 = vdwg.mxu0
    %568 = vst [vmem:[#allocation4] sm:$0x1] %v565
    %p569 = scmp.eq.s32.totalorder 0, 0
    // Predicated region
    $region18: #{tpu_custom_call.1} parent=1 // pred_check
      %p570 = pneg %p569
    $region19: #{tpu_custom_call.1} parent=1 // pred_check_branch
      %572 = sbr.rel (%p570) target = $region21
    $region20: #{tpu_custom_call.1} parent=1 // pred_region
      %573 = vst [vmem:[#allocation2] sm:$0x1] 0.0
    $region21: #{tpu_custom_call.1} parent=1 // pred_fallthru
      _
    %v574 = vld [vmem:[#allocation2] sm:$0x1]
    %v575 = vadd.f32 %v574, %v495
    %576 = vst [vmem:[#allocation2] sm:$0x1] %v575
    // Predicated region
    $region22: #{tpu_custom_call.1} parent=1 // pred_check
      _
    $region23: #{tpu_custom_call.1} parent=1 // pred_check_branch
      %578 = sbr.rel (0) target = $region25
    $region24: #{tpu_custom_call.1} parent=1 // pred_region
      %s580 = ssub.s32 16, 16
      %581 = vsyncadd [#allocation3], %s580
      %s583 = sshll.u32 [#allocation2], 4
      %s584 = int_to_ptr.vmem [resolvable:$true] %s583
      %586 = dma.vmem_to_hbm [thread:$0]  %s584, 16, %s4, [#allocation3]
    $region25: #{tpu_custom_call.1} parent=1 // pred_fallthru
      _
    // Predicated region
    $region26: #{tpu_custom_call.1} parent=1 // pred_check
      _
    $region27: #{tpu_custom_call.1} parent=1 // pred_check_branch
      %588 = sbr.rel (0) target = $region29
    $region28: #{tpu_custom_call.1} parent=1 // pred_region
      %s590 = ssub.s32 16, 16
      %591 = vsyncadd [#allocation5], %s590
      %s593 = sshll.u32 [#allocation4], 4
      %s594 = int_to_ptr.vmem [resolvable:$true] %s593
      %596 = dma.vmem_to_hbm [thread:$0]  %s594, 16, %s5, [#allocation5]
    $region29: #{tpu_custom_call.1} parent=1 // pred_fallthru
      _
    // Predicated region
    $region30: #{tpu_custom_call.1} parent=1 // pred_check
      _
    $region31: #{tpu_custom_call.1} parent=1 // pred_check_branch
      %598 = sbr.rel (0) target = $region33
    $region32: #{tpu_custom_call.1} parent=1 // pred_region
      %599 = dma.done [#allocation3], 16
    $region33: #{tpu_custom_call.1} parent=1 // pred_fallthru
      _
    // Predicated region
    $region34: #{tpu_custom_call.1} parent=1 // pred_check
      _
    $region35: #{tpu_custom_call.1} parent=1 // pred_check_branch
      %601 = sbr.rel (0) target = $region37
    $region36: #{tpu_custom_call.1} parent=1 // pred_region
      %602 = dma.done [#allocation5], 16
    $region37: #{tpu_custom_call.1} parent=1 // pred_fallthru
      _
    %603 = vsyncpa [#allocation3], 1
    %604 = vsyncpa [#allocation5], 1

</llo_original>
